<compile_context>
chip_gen: v6e
topology: v6e:2x2x1
jax: 0.10.0
libtpu: 0.0.40
codegen_flags: <defaults>
</compile_context>

<pallas_src>
from functools import partial

import numpy as np
import jax
import jax.numpy as jnp
from jax import lax
from jax.experimental import pallas as pl
from jax.experimental.pallas import tpu as pltpu

H_IN = 6          # input spatial size (6x6 -> conv 4x4 -> conv 2x2 -> pool 1x1)
H1 = H_IN - 2     # 4
H2 = H1 - 2       # 2


def _ceil(a, b):
    return -(-a // b)


def net1_kernel(x_ref, w1_ref, b1_ref, w2_ref, b2_ref, wfc_ref, bfc_ref, o_ref):
    # x_ref  : (Bt, 36)  natural batch-major flattened 6x6 input tile, f32
    # w1_ref : (96, 36)  fused conv1 im2col weights, bf16 (rows = (u,v,oc1))
    # b1_ref : (96, 1)   f32
    # w2_ref : (64, 96)  fused conv2 weights, bf16 (rows = (i,j,oc2))
    # b2_ref : (64, 1)   f32
    # wfc_ref: (16, 1)   fc1 weight as a column, f32
    # bfc_ref: (1, 1)    f32
    # o_ref  : (1, Bt)   f32, lane-dense store
    xb = x_ref[...].astype(jnp.bfloat16)                       # (Bt, 36) bf16

    # conv1 (1->6, k=3, valid) + ReLU, all 16 output positions in one MXU push.
    # Contraction over the last dim of both operands -> the batch/feature
    # transpose happens on-chip (XLU slot, idle under the MXU-bound body).
    h1 = lax.dot_general(w1_ref[...], xb,
                         dimension_numbers=(((1,), (1,)), ((), ())),
                         preferred_element_type=jnp.float32)   # (96, Bt) f32
    h1 = jnp.maximum(h1 + b1_ref[...], 0.0)

    # conv2 (6->16, k=3, valid) + ReLU, all 4 output positions in one MXU push.
    h2 = jnp.dot(w2_ref[...], h1.astype(jnp.bfloat16),
                 preferred_element_type=jnp.float32)           # (64, Bt) f32
    h2 = jnp.maximum(h2 + b2_ref[...], 0.0)

    # maxpool 2x2/stride 2 over the 2x2 conv2 map == elementwise max over the
    # four 16-channel sublane blocks (aligned, multiples of 8 sublanes).
    pooled = jnp.maximum(jnp.maximum(h2[0:16, :], h2[16:32, :]),
                         jnp.maximum(h2[32:48, :], h2[48:64, :]))   # (16, Bt)

    # flatten (already (16, Bt)) + fc1 (16 -> 1) as a sublane weighted sum.
    o_ref[...] = (jnp.sum(pooled * wfc_ref[...], axis=0, keepdims=True)
                  + bfc_ref[...])                              # (1, Bt)


def pack_params(params):
    """Build the fused weight matrices once per parameter set (pure NumPy, host)."""
    W1, B1, W2, B2, Wfc, Bfc = [np.asarray(p, np.float32) for p in params]

    # conv1 im2col: w1t[(u*4+v)*6 + oc1, (u+di)*6 + (v+dj)] = W1[oc1, 0, di, dj]
    u, v, oc1, di, dj = np.meshgrid(np.arange(H1), np.arange(H1), np.arange(6),
                                    np.arange(3), np.arange(3), indexing="ij")
    rows1 = ((u * H1 + v) * 6 + oc1).ravel()
    cols1 = ((u + di) * H_IN + (v + dj)).ravel()
    w1t = np.zeros((H1 * H1 * 6, H_IN * H_IN), np.float32)
    w1t[rows1, cols1] = W1[:, 0][oc1.ravel(), di.ravel(), dj.ravel()]
    b1c = np.tile(B1, H1 * H1).reshape(96, 1)

    # conv2 fused: w2t[(i*2+j)*16 + oc2, ((i+di)*4 + (j+dj))*6 + ic] = W2[oc2, ic, di, dj]
    i, j, oc2, ic, di2, dj2 = np.meshgrid(np.arange(H2), np.arange(H2), np.arange(16),
                                          np.arange(6), np.arange(3), np.arange(3),
                                          indexing="ij")
    rows2 = ((i * H2 + j) * 16 + oc2).ravel()
    cols2 = (((i + di2) * H1 + (j + dj2)) * 6 + ic).ravel()
    w2t = np.zeros((H2 * H2 * 16, H1 * H1 * 6), np.float32)
    w2t[rows2, cols2] = W2[oc2.ravel(), ic.ravel(), di2.ravel(), dj2.ravel()]
    b2c = np.tile(B2, H2 * H2).reshape(64, 1)

    wfcc = Wfc.reshape(1, 16).T.copy()             # (16, 1)
    bfcc = Bfc.reshape(1, 1)

    return (jnp.asarray(w1t, jnp.bfloat16),        # MXU operands in bf16
            jnp.asarray(b1c, jnp.float32),
            jnp.asarray(w2t, jnp.bfloat16),
            jnp.asarray(b2c, jnp.float32),
            jnp.asarray(wfcc, jnp.float32),
            jnp.asarray(bfcc, jnp.float32))


@partial(jax.jit, static_argnames=("block_b",))
def net1_forward(x_nchw, packed, block_b=8192):
    """x_nchw: (B, 1, 6, 6) float32. Returns (B, 1) float32."""
    w1t, b1c, w2t, b2c, wfcc, bfcc = packed
    B = x_nchw.shape[0]
    x2d = x_nchw.reshape(B, H_IN * H_IN).astype(jnp.float32)   # natural layout

    # Batch tile: multiple of 128 lanes, large to amortize per-step overhead.
    bt = max(128, (int(block_b) // 128) * 128)
    b128 = _ceil(B, 128) * 128
    bt = min(bt, b128)
    if b128 > 128:
        # Keep >= 2 grid steps so the "parallel" axis shards across both
        # TensorCores on v7x (harmless on single-TC v5e/v6e).
        bt = min(bt, _ceil(b128 // 2, 128) * 128)
    Bp = _ceil(B, bt) * bt
    grid = (Bp // bt,)

    if Bp != B:
        x2d = jnp.pad(x2d, ((0, Bp - B), (0, 0)))   # fuses under jit

    def fixed(shape):
        return pl.BlockSpec(shape, lambda i: (0, 0))   # VMEM-resident across steps

    out_cm = pl.pallas_call(
        net1_kernel,
        out_shape=jax.ShapeDtypeStruct((1, Bp), jnp.float32),
        grid=grid,
        in_specs=[
            pl.BlockSpec((bt, H_IN * H_IN), lambda i: (i, 0)),   # streamed input
            fixed((96, 36)), fixed((96, 1)),
            fixed((64, 96)), fixed((64, 1)),
            fixed((16, 1)), fixed((1, 1)),
        ],
        out_specs=pl.BlockSpec((1, bt), lambda i: (0, i)),       # lane-dense store
        compiler_params=pltpu.CompilerParams(
            dimension_semantics=("parallel",)),
    )(x2d, w1t, b1c, w2t, b2c, wfcc, bfcc)

    return out_cm[0, :B].reshape(B, 1)


def net1_reference(x_nchw, params):
    """Pure-JAX f32 reference matching PyTorch Net1.forward."""
    W1, B1, W2, B2, Wfc, Bfc = params
    dn = ("NCHW", "OIHW", "NCHW")
    hp = lax.Precision.HIGHEST
    y = lax.conv_general_dilated(x_nchw, W1, (1, 1), "VALID", dimension_numbers=dn,
                                 precision=hp) + B1[None, :, None, None]
    y = jnp.maximum(y, 0.0)
    y = lax.conv_general_dilated(y, W2, (1, 1), "VALID", dimension_numbers=dn,
                                 precision=hp) + B2[None, :, None, None]
    y = jnp.maximum(y, 0.0)
    y = lax.reduce_window(y, -jnp.inf, lax.max, (1, 1, 2, 2), (1, 1, 2, 2), "VALID")
    y = y.reshape(y.shape[0], -1)                               # (B, 16)
    return jnp.dot(y, Wfc.T, precision=hp) + Bfc


def net1_reference_bf16(x_nchw, params):
    """Reference with bf16-rounded activations/weights (f32 accumulation),
    emulating the kernel's MXU numerics — used for the tight check."""
    W1, B1, W2, B2, Wfc, Bfc = params
    r = lambda a: a.astype(jnp.bfloat16).astype(jnp.float32)
    dn = ("NCHW", "OIHW", "NCHW")
    hp = lax.Precision.HIGHEST
    y = lax.conv_general_dilated(r(x_nchw), r(W1), (1, 1), "VALID",
                                 dimension_numbers=dn,
                                 precision=hp) + B1[None, :, None, None]
    y = jnp.maximum(y, 0.0)
    y = lax.conv_general_dilated(r(y), r(W2), (1, 1), "VALID",
                                 dimension_numbers=dn,
                                 precision=hp) + B2[None, :, None, None]
    y = jnp.maximum(y, 0.0)
    y = lax.reduce_window(y, -jnp.inf, lax.max, (1, 1, 2, 2), (1, 1, 2, 2), "VALID")
    y = y.reshape(y.shape[0], -1)
    return jnp.dot(y, Wfc.T, precision=hp) + Bfc


def init_params(key):
    """Deterministic PyTorch-style uniform(-1/sqrt(fan_in), 1/sqrt(fan_in)) init."""
    ks = jax.random.split(key, 6)

    def u(k, shape, fan_in):
        bound = 1.0 / jnp.sqrt(jnp.float32(fan_in))
        return jax.random.uniform(k, shape, jnp.float32, -bound, bound)

    W1 = u(ks[0], (6, 1, 3, 3), 1 * 3 * 3)
    B1 = u(ks[1], (6,), 1 * 3 * 3)
    W2 = u(ks[2], (16, 6, 3, 3), 6 * 3 * 3)
    B2 = u(ks[3], (16,), 6 * 3 * 3)
    Wfc = u(ks[4], (1, 16), 16)
    Bfc = u(ks[5], (1,), 16)
    return (W1, B1, W2, B2, Wfc, Bfc)


if __name__ == "__main__":
    key = jax.random.PRNGKey(0)
    kx, kx2, kp = jax.random.split(key, 3)
    params = init_params(kp)
    packed = pack_params(params)        # built once per parameter set (host-side)

    # Small-batch check (single 128-lane tile, padded).
    B = 2
    x = jax.random.normal(kx, (B, 1, H_IN, H_IN), jnp.float32)   # NCHW
    out = jax.block_until_ready(net1_forward(x, packed))
    assert out.shape == (B, 1), out.shape
    ref_bf = net1_reference_bf16(x, params)
    ref_32 = net1_reference(x, params)
    assert jnp.allclose(out, ref_bf, rtol=1e-3, atol=1e-3), (out, ref_bf)
    assert jnp.allclose(out, ref_32, rtol=5e-2, atol=5e-2), (out, ref_32)

    # Multi-tile check: exercises the batch grid, pipelining and tail padding.
    Bn = 300
    x2 = jax.random.normal(kx2, (Bn, 1, H_IN, H_IN), jnp.float32)
    out2 = jax.block_until_ready(net1_forward(x2, packed, block_b=128))
    assert out2.shape == (Bn, 1), out2.shape
    ref2_bf = net1_reference_bf16(x2, params)
    ref2_32 = net1_reference(x2, params)
    assert jnp.allclose(out2, ref2_bf, rtol=1e-3, atol=1e-3)
    assert jnp.allclose(out2, ref2_32, rtol=5e-2, atol=5e-2)

    # Default (large-tile) path on the same batch, forces >=2 grid steps.
    out3 = jax.block_until_ready(net1_forward(x2, packed))
    assert jnp.allclose(out3, ref2_bf, rtol=1e-3, atol=1e-3)

    print("KERNEL_OK")
</pallas_src>

<mosaic_0001>
module attributes {stable_mosaic.version = 11 : i64} {
  func.func @net1_kernel(%arg0: i32, %arg1: memref<128x36xf32, #tpu.memory_space<vmem>>, %arg2: memref<96x36xbf16, #tpu.memory_space<vmem>>, %arg3: memref<96x1xf32, #tpu.memory_space<vmem>>, %arg4: memref<64x96xbf16, #tpu.memory_space<vmem>>, %arg5: memref<64x1xf32, #tpu.memory_space<vmem>>, %arg6: memref<16x1xf32, #tpu.memory_space<vmem>>, %arg7: memref<1x1xf32, #tpu.memory_space<vmem>>, %arg8: memref<1x128xf32, #tpu.memory_space<vmem>>) attributes {dimension_semantics = [#tpu.dimension_semantics<parallel>], iteration_bounds = array<i64: 1>, scalar_prefetch = 0 : i64, scratch_operands = 0 : i64, tpu.core_type = #tpu.core_type<tc>, window_params = [{transform_indices = @transform_0, window_bounds = array<i64: 128, 36>}, {pipeline_mode = #tpu.pipeline_mode<synchronous>, transform_indices = @transform_1, window_bounds = array<i64: 96, 36>}, {pipeline_mode = #tpu.pipeline_mode<synchronous>, transform_indices = @transform_2, window_bounds = array<i64: 96, 1>}, {pipeline_mode = #tpu.pipeline_mode<synchronous>, transform_indices = @transform_3, window_bounds = array<i64: 64, 96>}, {pipeline_mode = #tpu.pipeline_mode<synchronous>, transform_indices = @transform_4, window_bounds = array<i64: 64, 1>}, {pipeline_mode = #tpu.pipeline_mode<synchronous>, transform_indices = @transform_5, window_bounds = array<i64: 16, 1>}, {pipeline_mode = #tpu.pipeline_mode<synchronous>, transform_indices = @transform_6, window_bounds = array<i64: 1, 1>}, {transform_indices = @transform_7, window_bounds = array<i64: 1, 128>}]} {
    %c0 = arith.constant 0 : index
    %c0_0 = arith.constant 0 : index
    %0 = vector.load %arg1[%c0, %c0_0] : memref<128x36xf32, #tpu.memory_space<vmem>>, vector<128x36xf32>
    %1 = arith.truncf %0 : vector<128x36xf32> to vector<128x36xbf16>
    %c0_1 = arith.constant 0 : index
    %c0_2 = arith.constant 0 : index
    %2 = vector.load %arg2[%c0_1, %c0_2] : memref<96x36xbf16, #tpu.memory_space<vmem>>, vector<96x36xbf16>
    %cst = arith.constant dense<0.000000e+00> : vector<96x128xf32>
    %3 = tpu.matmul %2, %1, %cst {dimension_numbers = #tpu.dot_dimension_numbers<[1], [1], [0], [0], [0, 0, 1, 0], [], []>} : vector<96x36xbf16>, vector<128x36xbf16>, vector<96x128xf32> -> vector<96x128xf32>
    %c0_3 = arith.constant 0 : index
    %c0_4 = arith.constant 0 : index
    %4 = vector.load %arg3[%c0_3, %c0_4] : memref<96x1xf32, #tpu.memory_space<vmem>>, vector<96x1xf32>
    %5 = vector.broadcast %4 : vector<96x1xf32> to vector<96x128xf32>
    %6 = arith.addf %3, %5 : vector<96x128xf32>
    %cst_5 = arith.constant 0.000000e+00 : f32
    %7 = vector.broadcast %cst_5 : f32 to vector<96x128xf32>
    %8 = arith.maximumf %6, %7 : vector<96x128xf32>
    %c0_6 = arith.constant 0 : index
    %c0_7 = arith.constant 0 : index
    %9 = vector.load %arg4[%c0_6, %c0_7] : memref<64x96xbf16, #tpu.memory_space<vmem>>, vector<64x96xbf16>
    %10 = arith.truncf %8 : vector<96x128xf32> to vector<96x128xbf16>
    %cst_8 = arith.constant dense<0.000000e+00> : vector<64x128xf32>
    %11 = tpu.matmul %9, %10, %cst_8 {dimension_numbers = #tpu.dot_dimension_numbers<[1], [0], [0], [1], [0, 0, 1, 1], [], []>} : vector<64x96xbf16>, vector<96x128xbf16>, vector<64x128xf32> -> vector<64x128xf32>
    %c0_9 = arith.constant 0 : index
    %c0_10 = arith.constant 0 : index
    %12 = vector.load %arg5[%c0_9, %c0_10] : memref<64x1xf32, #tpu.memory_space<vmem>>, vector<64x1xf32>
    %13 = vector.broadcast %12 : vector<64x1xf32> to vector<64x128xf32>
    %14 = arith.addf %11, %13 : vector<64x128xf32>
    %cst_11 = arith.constant 0.000000e+00 : f32
    %15 = vector.broadcast %cst_11 : f32 to vector<64x128xf32>
    %16 = arith.maximumf %14, %15 : vector<64x128xf32>
    %17 = vector.extract_strided_slice %16 {offsets = [0, 0], sizes = [16, 128], strides = [1, 1]} : vector<64x128xf32> to vector<16x128xf32>
    %18 = vector.extract_strided_slice %16 {offsets = [16, 0], sizes = [16, 128], strides = [1, 1]} : vector<64x128xf32> to vector<16x128xf32>
    %19 = arith.maximumf %17, %18 : vector<16x128xf32>
    %20 = vector.extract_strided_slice %16 {offsets = [32, 0], sizes = [16, 128], strides = [1, 1]} : vector<64x128xf32> to vector<16x128xf32>
    %21 = vector.extract_strided_slice %16 {offsets = [48, 0], sizes = [16, 128], strides = [1, 1]} : vector<64x128xf32> to vector<16x128xf32>
    %22 = arith.maximumf %20, %21 : vector<16x128xf32>
    %23 = arith.maximumf %19, %22 : vector<16x128xf32>
    %c0_12 = arith.constant 0 : index
    %c0_13 = arith.constant 0 : index
    %24 = vector.load %arg6[%c0_12, %c0_13] : memref<16x1xf32, #tpu.memory_space<vmem>>, vector<16x1xf32>
    %25 = vector.broadcast %24 : vector<16x1xf32> to vector<16x128xf32>
    %26 = arith.mulf %23, %25 : vector<16x128xf32>
    %cst_14 = arith.constant dense<0.000000e+00> : vector<128xf32>
    %27 = vector.multi_reduction <add>, %26, %cst_14 [0] : vector<16x128xf32> to vector<128xf32>
    %28 = vector.shape_cast %27 : vector<128xf32> to vector<1x128xf32>
    %c0_15 = arith.constant 0 : index
    %c0_16 = arith.constant 0 : index
    %29 = vector.load %arg7[%c0_15, %c0_16] : memref<1x1xf32, #tpu.memory_space<vmem>>, vector<1x1xf32>
    %30 = vector.broadcast %29 : vector<1x1xf32> to vector<1x128xf32>
    %31 = arith.addf %28, %30 : vector<1x128xf32>
    %c0_17 = arith.constant 0 : index
    %c0_18 = arith.constant 0 : index
    %32 = vector.load %arg8[%c0_17, %c0_18] : memref<1x128xf32, #tpu.memory_space<vmem>>, vector<1x128xf32>
    tpu.vector_store %arg8[%c0_17, %c0_18], %31 {strides = array<i32>} : memref<1x128xf32, #tpu.memory_space<vmem>>, vector<1x128xf32>,
    return
  }
  func.func @transform_0(%arg0: i32) -> (i32, i32) {
    %c0_i32 = arith.constant 0 : i32
    %c0_i32_0 = arith.constant 0 : i32
    return %arg0, %c0_i32 : i32, i32
  }
  func.func @transform_1(%arg0: i32) -> (i32, i32) {
    %c0_i32 = arith.constant 0 : i32
    %c0_i32_0 = arith.constant 0 : i32
    %c0_i32_1 = arith.constant 0 : i32
    return %c0_i32, %c0_i32_0 : i32, i32
  }
  func.func @transform_2(%arg0: i32) -> (i32, i32) {
    %c0_i32 = arith.constant 0 : i32
    %c0_i32_0 = arith.constant 0 : i32
    %c0_i32_1 = arith.constant 0 : i32
    return %c0_i32, %c0_i32_0 : i32, i32
  }
  func.func @transform_3(%arg0: i32) -> (i32, i32) {
    %c0_i32 = arith.constant 0 : i32
    %c0_i32_0 = arith.constant 0 : i32
    %c0_i32_1 = arith.constant 0 : i32
    return %c0_i32, %c0_i32_0 : i32, i32
  }
  func.func @transform_4(%arg0: i32) -> (i32, i32) {
    %c0_i32 = arith.constant 0 : i32
    %c0_i32_0 = arith.constant 0 : i32
    %c0_i32_1 = arith.constant 0 : i32
    return %c0_i32, %c0_i32_0 : i32, i32
  }
  func.func @transform_5(%arg0: i32) -> (i32, i32) {
    %c0_i32 = arith.constant 0 : i32
    %c0_i32_0 = arith.constant 0 : i32
    %c0_i32_1 = arith.constant 0 : i32
    return %c0_i32, %c0_i32_0 : i32, i32
  }
  func.func @transform_6(%arg0: i32) -> (i32, i32) {
    %c0_i32 = arith.constant 0 : i32
    %c0_i32_0 = arith.constant 0 : i32
    %c0_i32_1 = arith.constant 0 : i32
    return %c0_i32, %c0_i32_0 : i32, i32
  }
  func.func @transform_7(%arg0: i32) -> (i32, i32) {
    %c0_i32 = arith.constant 0 : i32
    %c0_i32_0 = arith.constant 0 : i32
    return %c0_i32, %arg0 : i32, i32
  }
}

</mosaic_0001>

<llo_original>
// kernel: net1_forward.1
$region0: #{net1_forward.1}
  #allocation0 [shape = 'u32[]', space=smem, size = 0x4, offset = 0x4, fixed_abs, tag = 'smem constant byte address 0x4 - core index']
  #allocation1 [shape = 'u32[144,128]{1,0:T(1,128)}', space=vmem, size = 0x12000, scoped, tag = 'internal scratch']
  #allocation2 [shape = 'f32[1,1]{1,0:T(1,128)S(1)}', space=vmem, size = 0x200, scoped, tag = 'scoped memory for net1_forward.1']
  %s0 = inlined_call_operand.vmem [shape: f32[128,36], index: 0, kind: input, shape index: {}]
  %s1 = inlined_call_operand.vmem [shape: bf16[96,36], index: 1, kind: input, shape index: {}]
  %s2 = inlined_call_operand.vmem [shape: f32[96,1], index: 2, kind: input, shape index: {}]
  %s3 = inlined_call_operand.vmem [shape: bf16[64,96], index: 3, kind: input, shape index: {}]
  %s4 = inlined_call_operand.vmem [shape: f32[64,1], index: 4, kind: input, shape index: {}]
  %s5 = inlined_call_operand.vmem [shape: f32[16,1], index: 5, kind: input, shape index: {}]
  %s6 = inlined_call_operand.<no memory space> [shape: f32[1,1], index: 6, kind: input, shape index: {}]
  %s7 = inlined_call_operand.vmem [shape: f32[1,128], index: 7, kind: output, shape index: {}]
  %s8 = sld [smem:[#allocation0]]
  $region38: #{net1_forward.1} parent=0
    _
  %s10 = ssub.s32 1, %s8
  %s11 = scalar_select 0, %s10, %s8
  %v12 = vstv %s6
  %13 = vst [vmem:[#allocation2] sm:$0x1] %v12
  // Predicated region
  $region2: #{net1_forward.1} parent=0 // pred_check
    _
  $region3: #{net1_forward.1} parent=0 // pred_check_branch
    %15 = sbr.rel (0) target = $region5
  $region4: #{net1_forward.1} parent=0 // pred_region
    _
  $region5: #{net1_forward.1} parent=0 // pred_fallthru
    _
  // Predicated region
  $region6: #{net1_forward.1} parent=0 // pred_check
    _
  $region7: #{net1_forward.1} parent=0 // pred_check_branch
    %17 = sbr.rel (0) target = $region9
  $region8: #{net1_forward.1} parent=0 // pred_region
    _
  $region9: #{net1_forward.1} parent=0 // pred_fallthru
    _
  // Predicated region
  $region10: #{net1_forward.1} parent=0 // pred_check
    _
  $region11: #{net1_forward.1} parent=0 // pred_check_branch
    %19 = sbr.rel (0) target = $region13
  $region12: #{net1_forward.1} parent=0 // pred_region
    _
  $region13: #{net1_forward.1} parent=0 // pred_fallthru
    _
  // Predicated region
  $region14: #{net1_forward.1} parent=0 // pred_check
    _
  $region15: #{net1_forward.1} parent=0 // pred_check_branch
    %21 = sbr.rel (0) target = $region17
  $region16: #{net1_forward.1} parent=0 // pred_region
    _
  $region17: #{net1_forward.1} parent=0 // pred_fallthru
    _
  // Predicated region
  $region18: #{net1_forward.1} parent=0 // pred_check
    _
  $region19: #{net1_forward.1} parent=0 // pred_check_branch
    %23 = sbr.rel (0) target = $region21
  $region20: #{net1_forward.1} parent=0 // pred_region
    _
  $region21: #{net1_forward.1} parent=0 // pred_fallthru
    _
  // Predicated region
  $region22: #{net1_forward.1} parent=0 // pred_check
    _
  $region23: #{net1_forward.1} parent=0 // pred_check_branch
    %25 = sbr.rel (0) target = $region25
  $region24: #{net1_forward.1} parent=0 // pred_region
    _
  $region25: #{net1_forward.1} parent=0 // pred_fallthru
    _
  // Predicated region
  $region26: #{net1_forward.1} parent=0 // pred_check
    _
  $region27: #{net1_forward.1} parent=0 // pred_check_branch
    %27 = sbr.rel (0) target = $region29
  $region28: #{net1_forward.1} parent=0 // pred_region
    _
  $region29: #{net1_forward.1} parent=0 // pred_fallthru
    _
  %v29 = vld [vmem:[%s0] sm:$0xff]
  %v30 = vld [vmem:[%s0 + $0x8] sm:$0xff]
  %v31 = vld [vmem:[%s0 + $0x10] sm:$0xff]
  %v32 = vld [vmem:[%s0 + $0x18] sm:$0xff]
  %v33 = vld [vmem:[%s0 + $0x20] sm:$0xff]
  %v34 = vld [vmem:[%s0 + $0x28] sm:$0xff]
  %v35 = vld [vmem:[%s0 + $0x30] sm:$0xff]
  %v36 = vld [vmem:[%s0 + $0x38] sm:$0xff]
  %v37 = vld [vmem:[%s0 + $0x40] sm:$0xff]
  %v38 = vld [vmem:[%s0 + $0x48] sm:$0xff]
  %v39 = vld [vmem:[%s0 + $0x50] sm:$0xff]
  %v40 = vld [vmem:[%s0 + $0x58] sm:$0xff]
  %v41 = vld [vmem:[%s0 + $0x60] sm:$0xff]
  %v42 = vld [vmem:[%s0 + $0x68] sm:$0xff]
  %v43 = vld [vmem:[%s0 + $0x70] sm:$0xff]
  %v44 = vld [vmem:[%s0 + $0x78] sm:$0xff]
  %v45 = vpack.c.bf16 %v30, %v29
  %v46 = vpack.c.bf16 %v32, %v31
  %v47 = vpack.c.bf16 %v34, %v33
  %v48 = vpack.c.bf16 %v36, %v35
  %v49 = vpack.c.bf16 %v38, %v37
  %v50 = vpack.c.bf16 %v40, %v39
  %v51 = vpack.c.bf16 %v42, %v41
  %v52 = vpack.c.bf16 %v44, %v43
  %v53 = vld [vmem:[%s1] sm:$0xf]
  %v54 = vld [vmem:[%s1 + $0x4] sm:$0xf]
  %v55 = vld [vmem:[%s1 + $0x8] sm:$0xf]
  %v56 = vld [vmem:[%s1 + $0xc] sm:$0xf]
  %v57 = vld [vmem:[%s1 + $0x10] sm:$0xf]
  %v58 = vld [vmem:[%s1 + $0x14] sm:$0xf]
  %v59 = vld [vmem:[%s1 + $0x18] sm:$0xf]
  %v60 = vld [vmem:[%s1 + $0x1c] sm:$0xf]
  %v61 = vld [vmem:[%s1 + $0x20] sm:$0xf]
  %v62 = vld [vmem:[%s1 + $0x24] sm:$0xf]
  %v63 = vld [vmem:[%s1 + $0x28] sm:$0xf]
  %v64 = vld [vmem:[%s1 + $0x2c] sm:$0xf]
  %v65 = vld [vmem:[%s2] sm:$0xff]
  %v66 = vld [vmem:[%s2 + $0x8] sm:$0xff]
  %v67 = vld [vmem:[%s2 + $0x10] sm:$0xff]
  %v68 = vld [vmem:[%s2 + $0x18] sm:$0xff]
  %v69 = vld [vmem:[%s2 + $0x20] sm:$0xff]
  %v70 = vld [vmem:[%s2 + $0x28] sm:$0xff]
  %v71 = vld [vmem:[%s2 + $0x30] sm:$0xff]
  %v72 = vld [vmem:[%s2 + $0x38] sm:$0xff]
  %v73 = vld [vmem:[%s2 + $0x40] sm:$0xff]
  %v74 = vld [vmem:[%s2 + $0x48] sm:$0xff]
  %v75 = vld [vmem:[%s2 + $0x50] sm:$0xff]
  %v76 = vld [vmem:[%s2 + $0x58] sm:$0xff]
  %78 = vset.pattern.permute.xlu0 0
  %79 = vperm.xlu0 %78, %v65
  %v80 = vpop.permute.xlu0 %79
  %83 = vset.pattern.permute.xlu0 0
  %84 = vperm.xlu0 %83, %v66
  %v85 = vpop.permute.xlu0 %84
  %88 = vset.pattern.permute.xlu0 0
  %89 = vperm.xlu0 %88, %v67
  %v90 = vpop.permute.xlu0 %89
  %93 = vset.pattern.permute.xlu0 0
  %94 = vperm.xlu0 %93, %v68
  %v95 = vpop.permute.xlu0 %94
  %98 = vset.pattern.permute.xlu0 0
  %99 = vperm.xlu0 %98, %v69
  %v100 = vpop.permute.xlu0 %99
  %103 = vset.pattern.permute.xlu0 0
  %104 = vperm.xlu0 %103, %v70
  %v105 = vpop.permute.xlu0 %104
  %108 = vset.pattern.permute.xlu0 0
  %109 = vperm.xlu0 %108, %v71
  %v110 = vpop.permute.xlu0 %109
  %113 = vset.pattern.permute.xlu0 0
  %114 = vperm.xlu0 %113, %v72
  %v115 = vpop.permute.xlu0 %114
  %118 = vset.pattern.permute.xlu0 0
  %119 = vperm.xlu0 %118, %v73
  %v120 = vpop.permute.xlu0 %119
  %123 = vset.pattern.permute.xlu0 0
  %124 = vperm.xlu0 %123, %v74
  %v125 = vpop.permute.xlu0 %124
  %128 = vset.pattern.permute.xlu0 0
  %129 = vperm.xlu0 %128, %v75
  %v130 = vpop.permute.xlu0 %129
  %133 = vset.pattern.permute.xlu0 0
  %134 = vperm.xlu0 %133, %v76
  %v135 = vpop.permute.xlu0 %134
  %v149 = vunpack.c.l.b16 %v53
  %v150 = vunpack.c.l.b16 %v54
  %v151 = vunpack.c.l.b16 %v55
  %v152 = vunpack.c.l.b16 %v56
  %v153 = vunpack.c.l.b16 %v57
  %v154 = vunpack.c.l.b16 %v58
  %v155 = vunpack.c.l.b16 %v59
  %v156 = vunpack.c.l.b16 %v60
  %v157 = vunpack.c.l.b16 %v61
  %v158 = vunpack.c.l.b16 %v62
  %v159 = vunpack.c.l.b16 %v63
  %v160 = vunpack.c.l.b16 %v64
  %v161 = vpack.c.b16 %v150, %v149
  %v162 = vpack.c.b16 %v152, %v151
  %v163 = vpack.c.b16 %v154, %v153
  %v164 = vpack.c.b16 %v156, %v155
  %v165 = vpack.c.b16 %v158, %v157
  %v166 = vpack.c.b16 %v160, %v159
  %vm167 = vcmask 293888
  %v169 = vsel %vm167, %v161, 0
  %v172 = vsel %vm167, %v162, 0
  %v175 = vsel %vm167, %v163, 0
  %v178 = vsel %vm167, %v164, 0
  %v181 = vsel %vm167, %v165, 0
  %v184 = vsel %vm167, %v166, 0
  %v187 = vsel %vm167, %v45, 0
  %v190 = vsel %vm167, %v46, 0
  %v193 = vsel %vm167, %v47, 0
  %v196 = vsel %vm167, %v48, 0
  %v199 = vsel %vm167, %v49, 0
  %v202 = vsel %vm167, %v50, 0
  %v205 = vsel %vm167, %v51, 0
  %v208 = vsel %vm167, %v52, 0
  %210 = vmatprep.subr.bf16.mxu0 0
  %211 = vmatpush1.bf16.xpose.msra.mxu0 %v208
  %212 = vmatprep.subr.bf16.mxu0 0
  %213 = vmatpush1.bf16.xpose.msra.mxu0 %v205
  %214 = vmatprep.subr.bf16.mxu0 0
  %215 = vmatpush1.bf16.xpose.msra.mxu0 %v202
  %216 = vmatprep.subr.bf16.mxu0 0
  %217 = vmatpush1.bf16.xpose.msra.mxu0 %v199
  %218 = vmatprep.subr.bf16.mxu0 0
  %219 = vmatpush1.bf16.xpose.msra.mxu0 %v196
  %220 = vmatprep.subr.bf16.mxu0 0
  %221 = vmatpush1.bf16.xpose.msra.mxu0 %v193
  %222 = vmatprep.subr.bf16.mxu0 0
  %223 = vmatpush1.bf16.xpose.msra.mxu0 %v190
  %224 = vmatprep.subr.bf16.mxu0 0
  %225 = vmatpush1.bf16.xpose.msra.mxu0 %v187
  %226 = vmatprep.subr.bf16.mxu0 0
  %227 = vmatpush2.bf16.xpose.msra.mxu0 0
  %228 = vmatprep.subr.bf16.mxu0 0
  %229 = vmatpush2.bf16.xpose.msra.mxu0 0
  %230 = vmatprep.subr.bf16.mxu0 0
  %231 = vmatpush2.bf16.xpose.msra.mxu0 0
  %232 = vmatprep.subr.bf16.mxu0 0
  %233 = vmatpush2.bf16.xpose.msra.mxu0 0
  %234 = vmatprep.subr.bf16.mxu0 0
  %235 = vmatpush2.bf16.xpose.msra.mxu0 0
  %236 = vmatprep.subr.bf16.mxu0 0
  %237 = vmatpush2.bf16.xpose.msra.mxu0 0
  %238 = vmatprep.subr.bf16.mxu0 0
  %239 = vmatpush2.bf16.xpose.msra.mxu0 0
  %240 = vmatprep.subr.bf16.mxu0 0
  %241 = vmatpush2.bf16.xpose.msra.mxu0 0
  %242 = vmatprep.mubr.bf16.mxu0 0
  %243 = vmatmul.mubr.bf16.gmra.mxu0 %v169
  %v244 = vpop.f32.mrf.mxu0
  %v245 = vadd.f32 %v80, %v244
  %v246 = vpop.f32.mrf.mxu0
  %v247 = vpop.f32.mrf.mxu0
  %v248 = vadd.f32 %v85, %v247
  %v249 = vpop.f32.mrf.mxu0
  %250 = vmatprep.mubr.bf16.mxu0 0
  %251 = vmatmul.mubr.bf16.gmra.mxu0 %v172
  %v252 = vpop.f32.mrf.mxu0
  %v253 = vadd.f32 %v90, %v252
  %v254 = vpop.f32.mrf.mxu0
  %v255 = vpop.f32.mrf.mxu0
  %v256 = vadd.f32 %v95, %v255
  %v257 = vpop.f32.mrf.mxu0
  %258 = vmatprep.mubr.bf16.mxu0 0
  %259 = vmatmul.mubr.bf16.gmra.mxu0 %v175
  %v260 = vpop.f32.mrf.mxu0
  %v261 = vadd.f32 %v100, %v260
  %v262 = vpop.f32.mrf.mxu0
  %v263 = vpop.f32.mrf.mxu0
  %v264 = vadd.f32 %v105, %v263
  %v265 = vpop.f32.mrf.mxu0
  %266 = vmatprep.mubr.bf16.mxu0 0
  %267 = vmatmul.mubr.bf16.gmra.mxu0 %v178
  %v268 = vpop.f32.mrf.mxu0
  %v269 = vadd.f32 %v110, %v268
  %v270 = vpop.f32.mrf.mxu0
  %v271 = vpop.f32.mrf.mxu0
  %v272 = vadd.f32 %v115, %v271
  %v273 = vpop.f32.mrf.mxu0
  %274 = vmatprep.mubr.bf16.mxu0 0
  %275 = vmatmul.mubr.bf16.gmra.mxu0 %v181
  %v276 = vpop.f32.mrf.mxu0
  %v277 = vadd.f32 %v120, %v276
  %v278 = vpop.f32.mrf.mxu0
  %v279 = vpop.f32.mrf.mxu0
  %v280 = vadd.f32 %v125, %v279
  %v281 = vpop.f32.mrf.mxu0
  %282 = vmatprep.mubr.bf16.mxu0 0
  %283 = vmatmul.mubr.bf16.gmra.mxu0 %v184
  %v284 = vpop.f32.mrf.mxu0
  %v285 = vadd.f32 %v130, %v284
  %v286 = vpop.f32.mrf.mxu0
  %v287 = vpop.f32.mrf.mxu0
  %v288 = vadd.f32 %v135, %v287
  %v289 = vpop.f32.mrf.mxu0
  %290 = vdwg.mxu0
  %v291 = vmax.f32 %v245, 0.0
  %v292 = vmax.f32 %v248, 0.0
  %v293 = vmax.f32 %v253, 0.0
  %v294 = vmax.f32 %v256, 0.0
  %v295 = vmax.f32 %v261, 0.0
  %v296 = vmax.f32 %v264, 0.0
  %v297 = vmax.f32 %v269, 0.0
  %v298 = vmax.f32 %v272, 0.0
  %v299 = vmax.f32 %v277, 0.0
  %v300 = vmax.f32 %v280, 0.0
  %v301 = vmax.f32 %v285, 0.0
  %v302 = vmax.f32 %v288, 0.0
  %v303 = vld [vmem:[%s3] sm:$0xf]
  %v304 = vld [vmem:[%s3 + $0x4] sm:$0xf]
  %v305 = vld [vmem:[%s3 + $0x8] sm:$0xf]
  %v306 = vld [vmem:[%s3 + $0xc] sm:$0xf]
  %v307 = vld [vmem:[%s3 + $0x10] sm:$0xf]
  %v308 = vld [vmem:[%s3 + $0x14] sm:$0xf]
  %v309 = vld [vmem:[%s3 + $0x18] sm:$0xf]
  %v310 = vld [vmem:[%s3 + $0x1c] sm:$0xf]
  %v311 = vpack.c.bf16 %v292, %v291
  %v312 = vpack.c.bf16 %v294, %v293
  %v313 = vpack.c.bf16 %v296, %v295
  %v314 = vpack.c.bf16 %v298, %v297
  %v315 = vpack.c.bf16 %v300, %v299
  %v316 = vpack.c.bf16 %v302, %v301
  %v317 = vld [vmem:[%s4] sm:$0xff]
  %v318 = vld [vmem:[%s4 + $0x8] sm:$0xff]
  %v319 = vld [vmem:[%s4 + $0x10] sm:$0xff]
  %v320 = vld [vmem:[%s4 + $0x18] sm:$0xff]
  %v321 = vld [vmem:[%s4 + $0x20] sm:$0xff]
  %v322 = vld [vmem:[%s4 + $0x28] sm:$0xff]
  %v323 = vld [vmem:[%s4 + $0x30] sm:$0xff]
  %v324 = vld [vmem:[%s4 + $0x38] sm:$0xff]
  %326 = vset.pattern.permute.xlu0 0
  %327 = vperm.xlu0 %326, %v317
  %v328 = vpop.permute.xlu0 %327
  %331 = vset.pattern.permute.xlu0 0
  %332 = vperm.xlu0 %331, %v318
  %v333 = vpop.permute.xlu0 %332
  %336 = vset.pattern.permute.xlu0 0
  %337 = vperm.xlu0 %336, %v319
  %v338 = vpop.permute.xlu0 %337
  %341 = vset.pattern.permute.xlu0 0
  %342 = vperm.xlu0 %341, %v320
  %v343 = vpop.permute.xlu0 %342
  %346 = vset.pattern.permute.xlu0 0
  %347 = vperm.xlu0 %346, %v321
  %v348 = vpop.permute.xlu0 %347
  %351 = vset.pattern.permute.xlu0 0
  %352 = vperm.xlu0 %351, %v322
  %v353 = vpop.permute.xlu0 %352
  %356 = vset.pattern.permute.xlu0 0
  %357 = vperm.xlu0 %356, %v323
  %v358 = vpop.permute.xlu0 %357
  %361 = vset.pattern.permute.xlu0 0
  %362 = vperm.xlu0 %361, %v324
  %v363 = vpop.permute.xlu0 %362
  %v373 = vunpack.c.l.b16 %v303
  %v374 = vunpack.c.l.b16 %v304
  %v375 = vunpack.c.l.b16 %v305
  %v376 = vunpack.c.l.b16 %v306
  %v377 = vunpack.c.l.b16 %v307
  %v378 = vunpack.c.l.b16 %v308
  %v379 = vunpack.c.l.b16 %v309
  %v380 = vunpack.c.l.b16 %v310
  %v381 = vpack.c.b16 %v374, %v373
  %v382 = vpack.c.b16 %v376, %v375
  %v383 = vpack.c.b16 %v378, %v377
  %v384 = vpack.c.b16 %v380, %v379
  %vm385 = vcmask 785408
  %v387 = vsel %vm385, %v381, 0
  %v390 = vsel %vm385, %v382, 0
  %v393 = vsel %vm385, %v383, 0
  %v396 = vsel %vm385, %v384, 0
  %398 = vmatprep.subr.bf16.mxu0 0
  %399 = vmatpush1.bf16.msra.mxu0 0
  %400 = vmatprep.subr.bf16.mxu0 0
  %401 = vmatpush1.bf16.msra.mxu0 0
  %402 = vmatprep.subr.bf16.mxu0 0
  %403 = vmatpush1.bf16.msra.mxu0 %v316
  %404 = vmatprep.subr.bf16.mxu0 0
  %405 = vmatpush1.bf16.msra.mxu0 %v315
  %406 = vmatprep.subr.bf16.mxu0 0
  %407 = vmatpush1.bf16.msra.mxu0 %v314
  %408 = vmatprep.subr.bf16.mxu0 0
  %409 = vmatpush1.bf16.msra.mxu0 %v313
  %410 = vmatprep.subr.bf16.mxu0 0
  %411 = vmatpush1.bf16.msra.mxu0 %v312
  %412 = vmatprep.subr.bf16.mxu0 0
  %413 = vmatpush1.bf16.msra.mxu0 %v311
  %414 = vmatprep.subr.bf16.mxu0 0
  %415 = vmatpush2.bf16.msra.mxu0 0
  %416 = vmatprep.subr.bf16.mxu0 0
  %417 = vmatpush2.bf16.msra.mxu0 0
  %418 = vmatprep.subr.bf16.mxu0 0
  %419 = vmatpush2.bf16.msra.mxu0 0
  %420 = vmatprep.subr.bf16.mxu0 0
  %421 = vmatpush2.bf16.msra.mxu0 0
  %422 = vmatprep.subr.bf16.mxu0 0
  %423 = vmatpush2.bf16.msra.mxu0 0
  %424 = vmatprep.subr.bf16.mxu0 0
  %425 = vmatpush2.bf16.msra.mxu0 0
  %426 = vmatprep.subr.bf16.mxu0 0
  %427 = vmatpush2.bf16.msra.mxu0 0
  %428 = vmatprep.subr.bf16.mxu0 0
  %429 = vmatpush2.bf16.msra.mxu0 0
  %430 = vmatprep.mubr.bf16.mxu0 0
  %431 = vmatmul.mubr.bf16.gmra.mxu0 %v387
  %v432 = vpop.f32.mrf.mxu0
  %v433 = vadd.f32 %v328, %v432
  %v434 = vpop.f32.mrf.mxu0
  %v435 = vpop.f32.mrf.mxu0
  %v436 = vadd.f32 %v333, %v435
  %v437 = vpop.f32.mrf.mxu0
  %438 = vmatprep.mubr.bf16.mxu0 0
  %439 = vmatmul.mubr.bf16.gmra.mxu0 %v390
  %v440 = vpop.f32.mrf.mxu0
  %v441 = vadd.f32 %v338, %v440
  %v442 = vpop.f32.mrf.mxu0
  %v443 = vpop.f32.mrf.mxu0
  %v444 = vadd.f32 %v343, %v443
  %v445 = vpop.f32.mrf.mxu0
  %446 = vmatprep.mubr.bf16.mxu0 0
  %447 = vmatmul.mubr.bf16.gmra.mxu0 %v393
  %v448 = vpop.f32.mrf.mxu0
  %v449 = vadd.f32 %v348, %v448
  %v450 = vpop.f32.mrf.mxu0
  %v451 = vpop.f32.mrf.mxu0
  %v452 = vadd.f32 %v353, %v451
  %v453 = vpop.f32.mrf.mxu0
  %454 = vmatprep.mubr.bf16.mxu0 0
  %455 = vmatmul.mubr.bf16.gmra.mxu0 %v396
  %v456 = vpop.f32.mrf.mxu0
  %v457 = vadd.f32 %v358, %v456
  %v458 = vpop.f32.mrf.mxu0
  %v459 = vpop.f32.mrf.mxu0
  %v460 = vadd.f32 %v363, %v459
  %v461 = vpop.f32.mrf.mxu0
  %462 = vdwg.mxu0
  %v463 = vmax.f32 %v433, 0.0
  %v464 = vmax.f32 %v436, 0.0
  %v465 = vmax.f32 %v441, 0.0
  %v466 = vmax.f32 %v444, 0.0
  %v467 = vmax.f32 %v449, 0.0
  %v468 = vmax.f32 %v452, 0.0
  %v469 = vmax.f32 %v457, 0.0
  %v470 = vmax.f32 %v460, 0.0
  %v471 = vmax.f32 %v463, %v465
  %v472 = vmax.f32 %v464, %v466
  %v473 = vmax.f32 %v467, %v469
  %v474 = vmax.f32 %v468, %v470
  %v475 = vmax.f32 %v471, %v473
  %v476 = vmax.f32 %v472, %v474
  %v477 = vld [vmem:[%s5] sm:$0xff]
  %v478 = vld [vmem:[%s5 + $0x8] sm:$0xff]
  %480 = vset.pattern.permute.xlu0 0
  %481 = vperm.xlu0 %480, %v477
  %v482 = vpop.permute.xlu0 %481
  %485 = vset.pattern.permute.xlu0 0
  %486 = vperm.xlu0 %485, %v478
  %v487 = vpop.permute.xlu0 %486
  %v489 = vmul.f32 %v475, %v482
  %v490 = vmul.f32 %v476, %v487
  %v491 = vadd.f32 %v489, %v490
  %v492 = vrot.slane %v491, 4
  %v493 = vadd.f32 %v491, %v492
  %v494 = vrot.slane %v493, 2
  %v495 = vadd.f32 %v493, %v494
  %v496 = vrot.slane %v495, 1
  %v497 = vadd.f32 %v495, %v496
  %v498 = vld [vmem:[#allocation2] sm:$0x1]
  %500 = vset.pattern.permute.xlu0 0
  %501 = vperm.xlu0 %500, %v498
  %v502 = vpop.permute.xlu0 %501
  %v504 = vlaneseq
  %v505 = vshrl.u32 %v504, 7
  %v506 = vsub.s32 0, %v505
  %v507 = vrot.slane %v502, %v506
  %v508 = vadd.f32 %v497, %v507
  %509 = vst [vmem:[%s7] sm:$0x1] %v508
  // Predicated region
  $region30: #{net1_forward.1} parent=0 // pred_check
    _
  $region31: #{net1_forward.1} parent=0 // pred_check_branch
    %511 = sbr.rel (0) target = $region33
  $region32: #{net1_forward.1} parent=0 // pred_region
    _
  $region33: #{net1_forward.1} parent=0 // pred_fallthru
    _
  // Predicated region
  $region34: #{net1_forward.1} parent=0 // pred_check
    _
  $region35: #{net1_forward.1} parent=0 // pred_check_branch
    %513 = sbr.rel (0) target = $region37
  $region36: #{net1_forward.1} parent=0 // pred_region
    _
  $region37: #{net1_forward.1} parent=0 // pred_fallthru
    _

</llo_original>
